<compile_context>
chip_gen: v5e
topology: v5e:2x2
jax: 0.10.0
libtpu: 0.0.40
codegen_flags: <defaults>
</compile_context>

<pallas_src>
import jax
import jax.numpy as jnp
from jax.experimental import pallas as pl
from jax.experimental.pallas import tpu as pltpu

# ----------------------- problem configuration -----------------------------
NUM_CURVES = 8
IMAGE_SIZE = (16, 16)          # (H, W)
EPSILON = 0.001
CAP = 2000.0
NUM_PIXELS = float(IMAGE_SIZE[0] * IMAGE_SIZE[1])
INV_NUM_PIXELS = 1.0 / NUM_PIXELS


# ------------------------------ kernel -------------------------------------
def blob_kernel(x_ref, curves_ref, o_ref):
    # x_ref:      (tb, HW)  batch tile of flattened images
    # curves_ref: (HW, C)   resident curve map (already scaled by 1/num_pixels)
    # o_ref:      (tb, C)
    o_ref[...] = jnp.dot(
        x_ref[...], curves_ref[...], preferred_element_type=jnp.float32
    )


# --------------------- parameter-only curve precompute ---------------------
def blob_curves(positions, sigmas, curve_weights):
    """Build the (HW, C) curve map once per call (depends only on params)."""
    H, W = IMAGE_SIZE
    pos = positions.reshape(-1, 2).astype(jnp.float32)        # (C, 2) [y, x]
    sig = sigmas.reshape(1, -1).astype(jnp.float32)           # (1, C)
    w = curve_weights.reshape(1, -1).astype(jnp.float32)      # (1, C)

    # torch.linspace(0, 1, n+1)[:-1] == arange(n)/n
    y_axis = jnp.arange(H, dtype=jnp.float32) / H
    x_axis = jnp.arange(W, dtype=jnp.float32) / W
    ys, xs = jnp.meshgrid(y_axis, x_axis, indexing="ij")      # (H, W) each
    ys = ys.reshape(-1, 1)                                     # (HW, 1)
    xs = xs.reshape(-1, 1)                                     # (HW, 1)

    sig2 = sig * sig
    factor = 1.0 / (2.0 * jnp.pi * sig2 + EPSILON)             # (1, C)
    dist2 = (xs - pos[:, 1].reshape(1, -1)) ** 2 + (
        ys - pos[:, 0].reshape(1, -1)
    ) ** 2                                                     # (HW, C)
    curves = factor * jnp.exp(-dist2 / (2.0 * sig2 + EPSILON)) * w
    # Clip first (spec semantics), then fold in the 1/num_pixels scale.
    return jnp.clip(curves, -CAP, CAP) * INV_NUM_PIXELS        # (HW, C)


# ------------------------------ wrapper ------------------------------------
def _round_up(a, b):
    return ((a + b - 1) // b) * b


def blob_layer(x, positions, sigmas, curve_weights, *, max_tile_b=8192):
    """x: reshapeable to (-1, H, W).  positions: (C, 2), sigmas/weights: (C,)."""
    H, W = IMAGE_SIZE
    HW = H * W

    x_flat = x.reshape(-1, HW).astype(jnp.float32)
    B = x_flat.shape[0]

    curves = blob_curves(positions, sigmas, curve_weights)     # (HW, C)
    C = curves.shape[1]

    # Batch-tile selection:
    #  * tiny batches: one full-array block (uses the "block == full dim"
    #    exception to the (8,128) rule);
    #  * otherwise a multiple of 8, capped at max_tile_b, and sized so the
    #    grid has >= 2 steps (lets v7x shard the batch across both TCs).
    if B <= 8:
        tb = B
    else:
        tb = min(max_tile_b, _round_up(pl.cdiv(B, 2), 8))
    grid = (pl.cdiv(B, tb),)   # ragged final block handled by Pallas; no pad

    return pl.pallas_call(
        blob_kernel,
        out_shape=jax.ShapeDtypeStruct((B, C), jnp.float32),
        grid=grid,
        in_specs=[
            pl.BlockSpec((tb, HW), lambda i: (i, 0)),
            pl.BlockSpec((HW, C), lambda i: (0, 0)),   # resident curve map
        ],
        out_specs=pl.BlockSpec((tb, C), lambda i: (i, 0)),
        compiler_params=pltpu.CompilerParams(
            dimension_semantics=("parallel",),
            # 8 MiB x-tile double-buffered (16 MiB) + curves + output buffers;
            # explicit limit so tb=8192 also fits under v5e's 16 MiB default.
            vmem_limit_bytes=32 << 20,
        ),
    )(x_flat, curves)


# -------------------------- pure-JAX reference ------------------------------
def blob_layer_ref(x, positions, sigmas, curve_weights):
    H, W = IMAGE_SIZE
    x_ = x.reshape(-1, H, W)
    C = positions.reshape(-1, 2).shape[0]
    y_axis = jnp.linspace(0.0, 1.0, H + 1)[:-1]
    x_axis = jnp.linspace(0.0, 1.0, W + 1)[:-1]
    ys, xs = jnp.meshgrid(y_axis, x_axis, indexing="ij")
    sig = sigmas.reshape(1, 1, C)
    w = curve_weights.reshape(1, 1, C)
    pos = positions.reshape(C, 2)
    factor = 1.0 / (2.0 * jnp.pi * sig**2 + EPSILON)
    grid = (xs[:, :, None] - pos[:, 1].reshape(1, 1, C)) ** 2 + (
        ys[:, :, None] - pos[:, 0].reshape(1, 1, C)
    ) ** 2
    curves = factor * jnp.exp(-grid / (2.0 * sig**2 + EPSILON)) * w
    curves = jnp.clip(curves, -CAP, CAP)
    prod = curves[None] * x_[..., None]
    return jnp.sum(prod, axis=(1, 2)) / NUM_PIXELS


# ------------------------------- main --------------------------------------
if __name__ == "__main__":
    key = jax.random.PRNGKey(0)
    k_x, k_pos, k_sig, k_w = jax.random.split(key, 4)

    B = 2
    H, W = IMAGE_SIZE
    x = jax.random.normal(k_x, (B, H, W), dtype=jnp.float32)

    # deterministic parameter init, matching the torch.normal() distributions
    positions = 0.5 + 0.3 * jax.random.normal(k_pos, (NUM_CURVES, 2), dtype=jnp.float32)
    sigmas = 0.02 * jax.random.normal(k_sig, (NUM_CURVES,), dtype=jnp.float32)
    curve_weights = 0.2 * jax.random.normal(k_w, (NUM_CURVES,), dtype=jnp.float32)

    out = jax.block_until_ready(blob_layer(x, positions, sigmas, curve_weights))
    ref = jax.block_until_ready(blob_layer_ref(x, positions, sigmas, curve_weights))

    assert out.shape == (B, NUM_CURVES)
    assert jnp.allclose(out, ref, rtol=1e-4, atol=1e-4), "mismatch vs reference"

    print("KERNEL_OK")
</pallas_src>

<mosaic_0001>
module attributes {stable_mosaic.version = 11 : i64} {
  func.func @blob_kernel(%arg0: i32, %arg1: memref<2x256xf32, #tpu.memory_space<vmem>>, %arg2: memref<256x8xf32, #tpu.memory_space<vmem>>, %arg3: memref<2x8xf32, #tpu.memory_space<vmem>>) attributes {dimension_semantics = [#tpu.dimension_semantics<parallel>], iteration_bounds = array<i64: 1>, scalar_prefetch = 0 : i64, scratch_operands = 0 : i64, tpu.core_type = #tpu.core_type<tc>, window_params = [{transform_indices = @transform_0, window_bounds = array<i64: 2, 256>}, {pipeline_mode = #tpu.pipeline_mode<synchronous>, transform_indices = @transform_1, window_bounds = array<i64: 256, 8>}, {transform_indices = @transform_2, window_bounds = array<i64: 2, 8>}]} {
    %c0 = arith.constant 0 : index
    %c0_0 = arith.constant 0 : index
    %0 = vector.load %arg1[%c0, %c0_0] : memref<2x256xf32, #tpu.memory_space<vmem>>, vector<2x256xf32>
    %c0_1 = arith.constant 0 : index
    %c0_2 = arith.constant 0 : index
    %1 = vector.load %arg2[%c0_1, %c0_2] : memref<256x8xf32, #tpu.memory_space<vmem>>, vector<256x8xf32>
    %cst = arith.constant dense<0.000000e+00> : vector<2x8xf32>
    %2 = tpu.matmul %0, %1, %cst {dimension_numbers = #tpu.dot_dimension_numbers<[1], [0], [0], [1], [0, 0, 1, 1], [], []>} : vector<2x256xf32>, vector<256x8xf32>, vector<2x8xf32> -> vector<2x8xf32>
    %c0_3 = arith.constant 0 : index
    %c0_4 = arith.constant 0 : index
    %3 = vector.load %arg3[%c0_3, %c0_4] : memref<2x8xf32, #tpu.memory_space<vmem>>, vector<2x8xf32>
    tpu.vector_store %arg3[%c0_3, %c0_4], %2 {strides = array<i32>} : memref<2x8xf32, #tpu.memory_space<vmem>>, vector<2x8xf32>,
    return
  }
  func.func @transform_0(%arg0: i32) -> (i32, i32) {
    %c0_i32 = arith.constant 0 : i32
    %c0_i32_0 = arith.constant 0 : i32
    return %arg0, %c0_i32 : i32, i32
  }
  func.func @transform_1(%arg0: i32) -> (i32, i32) {
    %c0_i32 = arith.constant 0 : i32
    %c0_i32_0 = arith.constant 0 : i32
    %c0_i32_1 = arith.constant 0 : i32
    return %c0_i32, %c0_i32_0 : i32, i32
  }
  func.func @transform_2(%arg0: i32) -> (i32, i32) {
    %c0_i32 = arith.constant 0 : i32
    %c0_i32_0 = arith.constant 0 : i32
    return %arg0, %c0_i32 : i32, i32
  }
}

</mosaic_0001>

<llo_original>
// kernel: tpu_custom_call.1
$region0: #{tpu_custom_call.1}
  #allocation0 [shape = 'u32[]', space=smem, size = 0x4, offset = 0x4, fixed_abs, tag = 'smem constant byte address 0x4 - core index']
  #allocation1 [shape = 'u32[72,128]{1,0:T(1,128)}', space=vmem, size = 0x9000, scoped, tag = 'internal scratch']
  %s0 = inlined_call_operand.vmem [shape: f32[2,256], index: 0, kind: input, shape index: {}]
  %s1 = inlined_call_operand.vmem [shape: f32[256,8], index: 1, kind: input, shape index: {}]
  %s2 = inlined_call_operand.hbm [shape: f32[2,8], index: 2, kind: output, shape index: {}]
  %s3 = sld [smem:[#allocation0]]
  $region18: #{tpu_custom_call.1} parent=0
    _
  %s5 = ssub.s32 1, %s3
  %s6 = scalar_select 0, %s5, %s3
  $region1: #{tpu_custom_call.1} parent=0
    #allocation2 [shape = 'u8[1024]{0}', space=vmem, size = 0x400, scoped, tag = 'output window, operand 0, single buffered']
    #allocation3 [shape = 's32[1]{0}', space=sflag, size = 0x4, scoped, tag = 'scoped memory for tpu_custom_call.1']
    %7 = vsyncpa [#allocation3], 0
    // Predicated region
    $region2: #{tpu_custom_call.1} parent=1 // pred_check
      _
    $region3: #{tpu_custom_call.1} parent=1 // pred_check_branch
      %9 = sbr.rel (0) target = $region5
    $region4: #{tpu_custom_call.1} parent=1 // pred_region
      _
    $region5: #{tpu_custom_call.1} parent=1 // pred_fallthru
      _
    // Predicated region
    $region6: #{tpu_custom_call.1} parent=1 // pred_check
      _
    $region7: #{tpu_custom_call.1} parent=1 // pred_check_branch
      %11 = sbr.rel (0) target = $region9
    $region8: #{tpu_custom_call.1} parent=1 // pred_region
      _
    $region9: #{tpu_custom_call.1} parent=1 // pred_fallthru
      _
    %v12 = vld [vmem:[%s0] sm:$0xf]
    %v13 = vld [vmem:[%s1] sm:$0xff]
    %v14 = vld [vmem:[%s1 + $0x8] sm:$0xff]
    %v15 = vld [vmem:[%s1 + $0x10] sm:$0xff]
    %v16 = vld [vmem:[%s1 + $0x18] sm:$0xff]
    %v17 = vld [vmem:[%s1 + $0x20] sm:$0xff]
    %v18 = vld [vmem:[%s1 + $0x28] sm:$0xff]
    %v19 = vld [vmem:[%s1 + $0x30] sm:$0xff]
    %v20 = vld [vmem:[%s1 + $0x38] sm:$0xff]
    %v21 = vld [vmem:[%s1 + $0x40] sm:$0xff]
    %v22 = vld [vmem:[%s1 + $0x48] sm:$0xff]
    %v23 = vld [vmem:[%s1 + $0x50] sm:$0xff]
    %v24 = vld [vmem:[%s1 + $0x58] sm:$0xff]
    %v25 = vld [vmem:[%s1 + $0x60] sm:$0xff]
    %v26 = vld [vmem:[%s1 + $0x68] sm:$0xff]
    %v27 = vld [vmem:[%s1 + $0x70] sm:$0xff]
    %v28 = vld [vmem:[%s1 + $0x78] sm:$0xff]
    %v29 = vld [vmem:[%s1 + $0x80] sm:$0xff]
    %v30 = vld [vmem:[%s1 + $0x88] sm:$0xff]
    %v31 = vld [vmem:[%s1 + $0x90] sm:$0xff]
    %v32 = vld [vmem:[%s1 + $0x98] sm:$0xff]
    %v33 = vld [vmem:[%s1 + $0xa0] sm:$0xff]
    %v34 = vld [vmem:[%s1 + $0xa8] sm:$0xff]
    %v35 = vld [vmem:[%s1 + $0xb0] sm:$0xff]
    %v36 = vld [vmem:[%s1 + $0xb8] sm:$0xff]
    %v37 = vld [vmem:[%s1 + $0xc0] sm:$0xff]
    %v38 = vld [vmem:[%s1 + $0xc8] sm:$0xff]
    %v39 = vld [vmem:[%s1 + $0xd0] sm:$0xff]
    %v40 = vld [vmem:[%s1 + $0xd8] sm:$0xff]
    %v41 = vld [vmem:[%s1 + $0xe0] sm:$0xff]
    %v42 = vld [vmem:[%s1 + $0xe8] sm:$0xff]
    %v43 = vld [vmem:[%s1 + $0xf0] sm:$0xff]
    %v44 = vld [vmem:[%s1 + $0xf8] sm:$0xff]
    %46 = vst [vmem:[#allocation1] ss:$4 sm:$0xff] %v12
    %v47 = vld.sshfl [vmem:[#allocation1] sm:$0xff pattern:$0x73625140]
    %v48 = vld.sshfl [vmem:[#allocation1 + $0x8] sm:$0xff pattern:$0x73625140]
    %51 = vmatpush.msra.mxu0 %v28
    %52 = vmatpush.msra.mxu0 %v27
    %53 = vmatpush.msra.mxu0 %v26
    %54 = vmatpush.msra.mxu0 %v25
    %55 = vmatpush.msra.mxu0 %v24
    %56 = vmatpush.msra.mxu0 %v23
    %57 = vmatpush.msra.mxu0 %v22
    %58 = vmatpush.msra.mxu0 %v21
    %59 = vmatpush.msra.mxu0 %v20
    %60 = vmatpush.msra.mxu0 %v19
    %61 = vmatpush.msra.mxu0 %v18
    %62 = vmatpush.msra.mxu0 %v17
    %63 = vmatpush.msra.mxu0 %v16
    %64 = vmatpush.msra.mxu0 %v15
    %65 = vmatpush.msra.mxu0 %v14
    %66 = vmatpush.msra.mxu0 %v13
    %67 = vmatmul.f32.gmra.mxu0 %v47
    %v68 = vpop.f32.mrf.mxu0
    %v69 = vadd.f32 0.0, %v68
    %70 = vdwg.mxu0
    %71 = vmatpush.msra.mxu0 %v44
    %72 = vmatpush.msra.mxu0 %v43
    %73 = vmatpush.msra.mxu0 %v42
    %74 = vmatpush.msra.mxu0 %v41
    %75 = vmatpush.msra.mxu0 %v40
    %76 = vmatpush.msra.mxu0 %v39
    %77 = vmatpush.msra.mxu0 %v38
    %78 = vmatpush.msra.mxu0 %v37
    %79 = vmatpush.msra.mxu0 %v36
    %80 = vmatpush.msra.mxu0 %v35
    %81 = vmatpush.msra.mxu0 %v34
    %82 = vmatpush.msra.mxu0 %v33
    %83 = vmatpush.msra.mxu0 %v32
    %84 = vmatpush.msra.mxu0 %v31
    %85 = vmatpush.msra.mxu0 %v30
    %86 = vmatpush.msra.mxu0 %v29
    %87 = vmatmul.f32.gmra.mxu0 %v48
    %v88 = vpop.f32.mrf.mxu0
    %v89 = vadd.f32 %v69, %v88
    %90 = vdwg.mxu0
    %vm91 = vcmask 58368
    %92 = vst.msk [vmem:[#allocation2] sm:$0x3] %vm91, %v89
    // Predicated region
    $region10: #{tpu_custom_call.1} parent=1 // pred_check
      _
    $region11: #{tpu_custom_call.1} parent=1 // pred_check_branch
      %94 = sbr.rel (0) target = $region13
    $region12: #{tpu_custom_call.1} parent=1 // pred_region
      %96 = vsyncadd [#allocation3], 0
      %s98 = sshll.u32 [#allocation2], 4
      %s99 = int_to_ptr.vmem [resolvable:$true] %s98
      %s100 = sshll.u32 %s2, 4
      %s101 = int_to_ptr.hbm [resolvable:$true] %s100
      %103 = dma.vmem_to_hbm [thread:$0]  %s99, 32, %s101, [#allocation3]
    $region13: #{tpu_custom_call.1} parent=1 // pred_fallthru
      _
    // Predicated region
    $region14: #{tpu_custom_call.1} parent=1 // pred_check
      _
    $region15: #{tpu_custom_call.1} parent=1 // pred_check_branch
      %105 = sbr.rel (0) target = $region17
    $region16: #{tpu_custom_call.1} parent=1 // pred_region
      %107 = dma.done [#allocation3], 32
    $region17: #{tpu_custom_call.1} parent=1 // pred_fallthru
      _
    %108 = vsyncpa [#allocation3], 1

</llo_original>
